<compile_context>
chip_gen: v7x
topology: tpu7x:2x2x1
jax: 0.10.0
libtpu: 0.0.40
codegen_flags: <defaults>
</compile_context>

<pallas_src>
import functools
import math
from math import gcd

import jax
import jax.numpy as jnp
import numpy as np
from jax.experimental import pallas as pl
from jax.experimental.pallas import tpu as pltpu

# ----------------------------- configuration -----------------------------
NUM_TOKENS = 16
D_MODEL = 32
MAX_BLOCK_SIZE = 4            # blocks = [(1,0),(2,0),(3,0),(4,0)]
DOWNSAMPLE = 4
BATCH = 2
SEQ_LEN = 16                  # L

BLOCKS = tuple(range(1, MAX_BLOCK_SIZE + 1))
NB = len(BLOCKS)
BLOCK_PAD_MULTIPLE = functools.reduce(lambda a, b: a * b // gcd(a, b), BLOCKS, 1)  # 12
N_PAD = math.ceil(SEQ_LEN / BLOCK_PAD_MULTIPLE) * BLOCK_PAD_MULTIPLE               # 24
M_DOWN = math.ceil(SEQ_LEN / DOWNSAMPLE) * DOWNSAMPLE                              # 16
N_DOWN = M_DOWN // DOWNSAMPLE                                                      # 4
assert SEQ_LEN % DOWNSAMPLE == 0, "kernel layout assumes M_DOWN == SEQ_LEN"
N_Q = M_DOWN                  # query rows per batch actually consumed (== SEQ_LEN)
K = MAX_BLOCK_SIZE
PAD_L = (K - 1) // 2          # torch Conv1d padding='same' (even K): left 1, right 2
PAD_R = (K - 1) - PAD_L

BL = BATCH * SEQ_LEN          # 32  conv / char rows (batch folded on sublanes)
BQ = BATCH * N_Q              # 32  attention query rows
R = BATCH * N_PAD             # 48  attention key rows


# ------------------------------- the kernel -------------------------------
def gbst_kernel(tok_ref, wec_ref, baug_ref, sb_ref, acat_ref, kmask_ref,
                smask_ref, astack_ref, down_ref, charx_ref, xdown_ref):
    # --- fused embedding gather + Conv1d('same', K) + score column --------
    # one-hot of the pre-shifted token indices; -1 (conv padding) -> all-zero
    # row, which implements the zero padding exactly.
    toks = tok_ref[...]                                              # (BL, K) i32
    lane_iota = jax.lax.broadcasted_iota(jnp.int32, (BL, NUM_TOKENS), 1)
    onehot = jnp.concatenate(
        [(toks[:, k:k + 1] == lane_iota).astype(jnp.float32) for k in range(K)],
        axis=1).astype(jnp.bfloat16)                                 # (BL, K*T)
    # single MXU matmul against the pre-fused emb @ [W_k | W_k @ score_w]
    conv_aug = jnp.dot(onehot, wec_ref[...],
                       preferred_element_type=jnp.float32) + baug_ref[...]  # (BL, D+1)
    conv = conv_aug[:, :D_MODEL]                                     # (BL, D)
    v = conv_aug[:, D_MODEL:D_MODEL + 1]                             # (BL, 1) score logit

    # --- block scores for all block sizes & both batches in one matmul ----
    #   scores[r, c] = A_c(row r, same batch) @ v      (associativity trick)
    v_rep = jnp.concatenate([v] * NB, axis=0)                        # (NB*BL, 1)
    v_bd = (v_rep * kmask_ref[...]).astype(jnp.bfloat16)             # (NB*BL, NB)
    scores = jnp.dot(acat_ref[...], v_bd,
                     preferred_element_type=jnp.float32) + sb_ref[...]       # (R, NB)

    s = scores - jnp.max(scores, axis=1, keepdims=True)              # softmax (block axis)
    e = jnp.exp(s)
    p = e / jnp.sum(e, axis=1, keepdims=True)                        # (R, NB)

    # --- score consensus attention (queries = consumed rows only) ---------
    p_q = p[:BQ]                                                     # (BQ, NB)
    sim = jax.lax.dot_general(p_q, p, (((1,), (1,)), ((), ())),
                              preferred_element_type=jnp.float32)    # (BQ, R)
    sim = sim + smask_ref[...]                                       # -1e30 cross-batch
    sim = sim - jnp.max(sim, axis=1, keepdims=True)
    es = jnp.exp(sim)
    attn = es / jnp.sum(es, axis=1, keepdims=True)
    p2 = jnp.dot(attn, p, preferred_element_type=jnp.float32)        # (BQ, NB)

    # --- weighted block mix, collapsed into one mixing operator -----------
    #   x_out = (sum_c p2[:, c] * A_c_bd) @ conv
    w_mix = astack_ref[0] * p2[:, 0:1]
    for c in range(1, NB):
        w_mix = w_mix + astack_ref[c] * p2[:, c:c + 1]               # (BQ, BL)
    x_out = jnp.dot(w_mix.astype(jnp.bfloat16), conv.astype(jnp.bfloat16),
                    preferred_element_type=jnp.float32)              # (BQ, D)

    # single lane-dense slab stores (reshaped to (B, ., D) in the wrapper)
    charx_ref[...] = x_out
    xdown_ref[...] = jnp.dot(down_ref[...], x_out.astype(jnp.bfloat16),
                             preferred_element_type=jnp.float32)     # (B*N_DOWN, D)


# ------------------------------- the wrapper -------------------------------
@jax.jit
def gbst_forward(tokens, kp):
    # TODO(synk): only tiny int32 index shifting stays outside the kernel; the
    # float embedding gather / conv / im2col are fused in-kernel as a one-hot
    # matmul.
    tok_pad = jnp.pad(tokens, ((0, 0), (PAD_L, PAD_R)), constant_values=-1)
    tok_shift = jnp.stack([tok_pad[:, k:k + SEQ_LEN] for k in range(K)], axis=-1)
    tok_shift = tok_shift.reshape(BL, K).astype(jnp.int32)

    vmem = lambda: pl.BlockSpec(memory_space=pltpu.MemorySpace.VMEM)
    out_shapes = (
        jax.ShapeDtypeStruct((BL, D_MODEL), jnp.float32),
        jax.ShapeDtypeStruct((BATCH * N_DOWN, D_MODEL), jnp.float32),
    )
    charx, xdown = pl.pallas_call(
        gbst_kernel,
        out_shape=out_shapes,
        in_specs=[vmem() for _ in range(9)],
        out_specs=(vmem(), vmem()),
        cost_estimate=pl.CostEstimate(flops=291_000, transcendentals=1_728,
                                      bytes_accessed=48_000),
    )(tok_shift, kp["w_emb_conv"], kp["b_aug"], kp["score_b"],
      kp["a_cat_bd"], kp["kmask_bd"], kp["sim_mask"],
      kp["astack_bd"], kp["down_bd"])

    char_x = charx.reshape(BATCH, SEQ_LEN, D_MODEL)
    x_down = xdown.reshape(BATCH, N_DOWN, D_MODEL)
    # matches GBST.forward return signature (char_x[:, :L], downsampled x, mask)
    return char_x, x_down, None


# --------------------------- parameter construction ---------------------------
def init_params(key):
    k1, k2, k3, k4, k5 = jax.random.split(key, 5)
    emb = jax.random.normal(k1, (NUM_TOKENS, D_MODEL), jnp.float32) * 0.5
    # torch Conv1d weight has shape (D_out, D_in, K); we store (K, D_in, D_out)
    conv_w_t = jax.random.normal(k2, (D_MODEL, D_MODEL, K), jnp.float32)
    conv_w_t = conv_w_t * (1.0 / math.sqrt(D_MODEL * K))
    conv_w = jnp.transpose(conv_w_t, (2, 1, 0))
    conv_b = jax.random.normal(k3, (1, D_MODEL), jnp.float32) * 0.1
    # torch Linear(D,1) weight (1, D); we use its transpose (D, 1)
    score_w = jax.random.normal(k4, (D_MODEL, 1), jnp.float32) * (1.0 / math.sqrt(D_MODEL))
    score_b = jax.random.normal(k5, (1, 1), jnp.float32) * 0.1
    return dict(emb=emb, conv_w=conv_w, conv_b=conv_b,
                score_w=score_w, score_b=score_b)


def prepare_kernel_params(p):
    """Precompute the fused / block-diagonal kernel constants (numpy, once)."""
    emb = np.asarray(p["emb"])            # (T, D)
    conv_w = np.asarray(p["conv_w"])      # (K, Din, Dout)
    conv_b = np.asarray(p["conv_b"])      # (1, D)
    sw = np.asarray(p["score_w"])         # (D, 1)

    # fused embedding+conv table with the score column folded in:
    #   row (k*T + t) = emb[t] @ [W_k | W_k @ score_w]
    w_blocks = []
    for k in range(K):
        wk_aug = np.concatenate([conv_w[k], conv_w[k] @ sw], axis=1)   # (D, D+1)
        w_blocks.append(emb @ wk_aug)                                   # (T, D+1)
    w_emb_conv = np.concatenate(w_blocks, axis=0)                       # (K*T, D+1)
    b_aug = np.concatenate([conv_b, conv_b @ sw], axis=1)               # (1, D+1)

    # per-block-size averaging matrices restricted to real (un-padded) columns
    idx = np.arange(N_PAD)
    jdx = np.arange(SEQ_LEN)
    A = [((idx[:, None] // m) == (jdx[None, :] // m)).astype(np.float32) / m
         for m in BLOCKS]                                                # (N_PAD, L) each

    # permuted row order: consumed query rows first, padded tail rows last
    row_bn = ([(b, n) for b in range(BATCH) for n in range(N_Q)] +
              [(b, n) for b in range(BATCH) for n in range(N_Q, N_PAD)])

    # batch-block-diagonal score operator, columns ordered (c, b, j)
    a_cat_bd = np.zeros((R, NB * BL), np.float32)
    for r, (b, n) in enumerate(row_bn):
        for c in range(NB):
            col0 = c * BL + b * SEQ_LEN
            a_cat_bd[r, col0:col0 + SEQ_LEN] = A[c][n]

    # block-size selector for the tiled v column
    kmask_bd = (np.arange(NB * BL)[:, None] // BL
                == np.arange(NB)[None, :]).astype(np.float32)            # (NB*BL, NB)

    # cross-batch consensus-attention mask (queries x all rows)
    q_batch = np.array([b for (b, _) in row_bn[:BQ]])
    k_batch = np.array([b for (b, _) in row_bn])
    sim_mask = np.where(q_batch[:, None] == k_batch[None, :],
                        0.0, -1e30).astype(np.float32)                   # (BQ, R)

    # batch-block-diagonal mixing operators restricted to query rows
    astack_bd = np.zeros((NB, BQ, BL), np.float32)
    for r, (b, n) in enumerate(row_bn[:BQ]):
        for c in range(NB):
            astack_bd[c, r, b * SEQ_LEN:(b + 1) * SEQ_LEN] = A[c][n]

    # batch-block-diagonal downsample pooling
    down_bd = np.zeros((BATCH * N_DOWN, BQ), np.float32)
    for b in range(BATCH):
        for i in range(N_DOWN):
            c0 = b * N_Q + i * DOWNSAMPLE
            down_bd[b * N_DOWN + i, c0:c0 + DOWNSAMPLE] = 1.0 / DOWNSAMPLE

    return dict(
        w_emb_conv=jnp.asarray(w_emb_conv, dtype=jnp.bfloat16),
        b_aug=jnp.asarray(b_aug, dtype=jnp.float32),
        score_b=jnp.asarray(p["score_b"], dtype=jnp.float32),
        a_cat_bd=jnp.asarray(a_cat_bd, dtype=jnp.bfloat16),
        kmask_bd=jnp.asarray(kmask_bd, dtype=jnp.float32),
        sim_mask=jnp.asarray(sim_mask, dtype=jnp.float32),
        astack_bd=jnp.asarray(astack_bd, dtype=jnp.float32),
        down_bd=jnp.asarray(down_bd, dtype=jnp.bfloat16),
    )


# ----------------------------- numpy reference -----------------------------
def reference_forward_np(tokens, params):
    emb = np.asarray(params["emb"])
    conv_w = np.asarray(params["conv_w"])        # (K, Din, Dout)
    conv_b = np.asarray(params["conv_b"])[0]
    score_w = np.asarray(params["score_w"])[:, 0]
    score_b = float(np.asarray(params["score_b"])[0, 0])
    B = tokens.shape[0]

    x = emb[tokens]                                              # (B, L, D)
    xp = np.pad(x, ((0, 0), (PAD_L, PAD_R), (0, 0)))
    conv = np.zeros((B, SEQ_LEN, D_MODEL), np.float32)
    for k in range(K):
        conv += xp[:, k:k + SEQ_LEN, :] @ conv_w[k]
    conv += conv_b

    xpad = np.concatenate(
        [conv, np.zeros((B, N_PAD - SEQ_LEN, D_MODEL), np.float32)], axis=1)

    reprs = []
    for m in BLOCKS:
        blocks = xpad.reshape(B, N_PAD // m, m, D_MODEL)
        reprs.append(np.repeat(blocks.mean(axis=2), m, axis=1))
    block_reprs = np.stack(reprs, axis=2)                        # (B, N, NB, D)

    def softmax(a, axis):
        a = a - a.max(axis=axis, keepdims=True)
        e = np.exp(a)
        return e / e.sum(axis=axis, keepdims=True)

    scores = block_reprs @ score_w + score_b                     # (B, N, NB)
    scores = softmax(scores, 2)
    sim = np.einsum('bic,bjc->bij', scores, scores)
    attn = softmax(sim, -1)
    scores = np.einsum('bij,bjc->bic', attn, scores)
    x_out = (block_reprs * scores[..., None]).sum(axis=2)        # (B, N, D)
    char_x = x_out[:, :M_DOWN]
    x_down = char_x.reshape(B, N_DOWN, DOWNSAMPLE, D_MODEL).mean(axis=2)
    return x_out[:, :SEQ_LEN], x_down


# ---------------------------------- main ----------------------------------
if __name__ == "__main__":
    key = jax.random.PRNGKey(0)
    pkey, tkey = jax.random.split(key)
    params = init_params(pkey)
    kparams = prepare_kernel_params(params)
    tokens = jax.random.randint(tkey, (BATCH, SEQ_LEN), 0, NUM_TOKENS, dtype=jnp.int32)

    char_x, x_down, mask = gbst_forward(tokens, kparams)
    jax.block_until_ready((char_x, x_down))

    assert char_x.shape == (BATCH, SEQ_LEN, D_MODEL)
    assert x_down.shape == (BATCH, N_DOWN, D_MODEL)
    assert mask is None

    ref_char, ref_down = reference_forward_np(np.asarray(tokens), params)
    np.testing.assert_allclose(np.asarray(char_x), ref_char, rtol=1e-2, atol=1e-2)
    np.testing.assert_allclose(np.asarray(x_down), ref_down, rtol=1e-2, atol=1e-2)

    print("KERNEL_OK")
</pallas_src>

<mosaic_0001>
module attributes {stable_mosaic.version = 11 : i64} {
  func.func @gbst_kernel(%arg0: memref<32x4xi32, #tpu.memory_space<vmem>>, %arg1: memref<64x33xbf16, #tpu.memory_space<vmem>>, %arg2: memref<1x33xf32, #tpu.memory_space<vmem>>, %arg3: memref<1x1xf32, #tpu.memory_space<vmem>>, %arg4: memref<48x128xbf16, #tpu.memory_space<vmem>>, %arg5: memref<128x4xf32, #tpu.memory_space<vmem>>, %arg6: memref<32x48xf32, #tpu.memory_space<vmem>>, %arg7: memref<4x32x32xf32, #tpu.memory_space<vmem>>, %arg8: memref<8x32xbf16, #tpu.memory_space<vmem>>, %arg9: memref<32x32xf32, #tpu.memory_space<vmem>>, %arg10: memref<8x32xf32, #tpu.memory_space<vmem>>) attributes {dimension_semantics = [], scalar_prefetch = 0 : i64, scratch_operands = 0 : i64, tpu.core_type = #tpu.core_type<tc>} {
    %c0 = arith.constant 0 : index
    %c0_0 = arith.constant 0 : index
    %0 = vector.load %arg0[%c0, %c0_0] : memref<32x4xi32, #tpu.memory_space<vmem>>, vector<32x4xi32>
    %1 = tpu.iota {dimensions = array<i32: 1>} : vector<32x16xi32>
    %2 = vector.extract_strided_slice %0 {offsets = [0, 0], sizes = [32, 1], strides = [1, 1]} : vector<32x4xi32> to vector<32x1xi32>
    %3 = vector.broadcast %2 : vector<32x1xi32> to vector<32x16xi32>
    %4 = arith.cmpi eq, %3, %1 : vector<32x16xi32>
    %5 = arith.extui %4 : vector<32x16xi1> to vector<32x16xi32>
    %6 = arith.sitofp %5 : vector<32x16xi32> to vector<32x16xf32>
    %7 = vector.extract_strided_slice %0 {offsets = [0, 1], sizes = [32, 1], strides = [1, 1]} : vector<32x4xi32> to vector<32x1xi32>
    %8 = vector.broadcast %7 : vector<32x1xi32> to vector<32x16xi32>
    %9 = arith.cmpi eq, %8, %1 : vector<32x16xi32>
    %10 = arith.extui %9 : vector<32x16xi1> to vector<32x16xi32>
    %11 = arith.sitofp %10 : vector<32x16xi32> to vector<32x16xf32>
    %12 = vector.extract_strided_slice %0 {offsets = [0, 2], sizes = [32, 1], strides = [1, 1]} : vector<32x4xi32> to vector<32x1xi32>
    %13 = vector.broadcast %12 : vector<32x1xi32> to vector<32x16xi32>
    %14 = arith.cmpi eq, %13, %1 : vector<32x16xi32>
    %15 = arith.extui %14 : vector<32x16xi1> to vector<32x16xi32>
    %16 = arith.sitofp %15 : vector<32x16xi32> to vector<32x16xf32>
    %17 = vector.extract_strided_slice %0 {offsets = [0, 3], sizes = [32, 1], strides = [1, 1]} : vector<32x4xi32> to vector<32x1xi32>
    %18 = vector.broadcast %17 : vector<32x1xi32> to vector<32x16xi32>
    %19 = arith.cmpi eq, %18, %1 : vector<32x16xi32>
    %20 = arith.extui %19 : vector<32x16xi1> to vector<32x16xi32>
    %21 = arith.sitofp %20 : vector<32x16xi32> to vector<32x16xf32>
    %22 = tpu.concatenate %6, %11, %16, %21 in 1 : vector<32x16xf32>, vector<32x16xf32>, vector<32x16xf32>, vector<32x16xf32> -> vector<32x64xf32>
    %23 = arith.truncf %22 : vector<32x64xf32> to vector<32x64xbf16>
    %c0_1 = arith.constant 0 : index
    %c0_2 = arith.constant 0 : index
    %24 = vector.load %arg1[%c0_1, %c0_2] : memref<64x33xbf16, #tpu.memory_space<vmem>>, vector<64x33xbf16>
    %cst = arith.constant dense<0.000000e+00> : vector<32x33xf32>
    %25 = tpu.matmul %23, %24, %cst {dimension_numbers = #tpu.dot_dimension_numbers<[1], [0], [0], [1], [0, 0, 1, 1], [], []>} : vector<32x64xbf16>, vector<64x33xbf16>, vector<32x33xf32> -> vector<32x33xf32>
    %c0_3 = arith.constant 0 : index
    %c0_4 = arith.constant 0 : index
    %26 = vector.load %arg2[%c0_3, %c0_4] : memref<1x33xf32, #tpu.memory_space<vmem>>, vector<1x33xf32>
    %27 = vector.broadcast %26 : vector<1x33xf32> to vector<32x33xf32>
    %28 = arith.addf %25, %27 : vector<32x33xf32>
    %29 = vector.extract_strided_slice %28 {offsets = [0, 0], sizes = [32, 32], strides = [1, 1]} : vector<32x33xf32> to vector<32x32xf32>
    %30 = vector.extract_strided_slice %28 {offsets = [0, 32], sizes = [32, 1], strides = [1, 1]} : vector<32x33xf32> to vector<32x1xf32>
    %31 = tpu.concatenate %30, %30, %30, %30 in 0 : vector<32x1xf32>, vector<32x1xf32>, vector<32x1xf32>, vector<32x1xf32> -> vector<128x1xf32>
    %c0_5 = arith.constant 0 : index
    %c0_6 = arith.constant 0 : index
    %32 = vector.load %arg5[%c0_5, %c0_6] : memref<128x4xf32, #tpu.memory_space<vmem>>, vector<128x4xf32>
    %33 = vector.broadcast %31 : vector<128x1xf32> to vector<128x4xf32>
    %34 = arith.mulf %33, %32 : vector<128x4xf32>
    %35 = arith.truncf %34 : vector<128x4xf32> to vector<128x4xbf16>
    %c0_7 = arith.constant 0 : index
    %c0_8 = arith.constant 0 : index
    %36 = vector.load %arg4[%c0_7, %c0_8] : memref<48x128xbf16, #tpu.memory_space<vmem>>, vector<48x128xbf16>
    %cst_9 = arith.constant dense<0.000000e+00> : vector<48x4xf32>
    %37 = tpu.matmul %36, %35, %cst_9 {dimension_numbers = #tpu.dot_dimension_numbers<[1], [0], [0], [1], [0, 0, 1, 1], [], []>} : vector<48x128xbf16>, vector<128x4xbf16>, vector<48x4xf32> -> vector<48x4xf32>
    %c0_10 = arith.constant 0 : index
    %c0_11 = arith.constant 0 : index
    %38 = vector.load %arg3[%c0_10, %c0_11] : memref<1x1xf32, #tpu.memory_space<vmem>>, vector<1x1xf32>
    %39 = vector.broadcast %38 : vector<1x1xf32> to vector<48x4xf32>
    %40 = arith.addf %37, %39 : vector<48x4xf32>
    %cst_12 = arith.constant dense<0xFF800000> : vector<48xf32>
    %41 = vector.multi_reduction <maximumf>, %40, %cst_12 [1] : vector<48x4xf32> to vector<48xf32>
    %42 = vector.shape_cast %41 : vector<48xf32> to vector<48x1xf32>
    %43 = vector.broadcast %42 : vector<48x1xf32> to vector<48x4xf32>
    %44 = arith.subf %40, %43 : vector<48x4xf32>
    %45 = math.exp %44 : vector<48x4xf32>
    %cst_13 = arith.constant dense<0.000000e+00> : vector<48xf32>
    %46 = vector.multi_reduction <add>, %45, %cst_13 [1] : vector<48x4xf32> to vector<48xf32>
    %47 = vector.shape_cast %46 : vector<48xf32> to vector<48x1xf32>
    %48 = vector.broadcast %47 : vector<48x1xf32> to vector<48x4xf32>
    %49 = arith.divf %45, %48 : vector<48x4xf32>
    %50 = vector.extract_strided_slice %49 {offsets = [0, 0], sizes = [32, 4], strides = [1, 1]} : vector<48x4xf32> to vector<32x4xf32>
    %cst_14 = arith.constant dense<0.000000e+00> : vector<32x48xf32>
    %51 = tpu.matmul %50, %49, %cst_14 {dimension_numbers = #tpu.dot_dimension_numbers<[1], [1], [0], [0], [0, 0, 1, 0], [], []>} : vector<32x4xf32>, vector<48x4xf32>, vector<32x48xf32> -> vector<32x48xf32>
    %c0_15 = arith.constant 0 : index
    %c0_16 = arith.constant 0 : index
    %52 = vector.load %arg6[%c0_15, %c0_16] : memref<32x48xf32, #tpu.memory_space<vmem>>, vector<32x48xf32>
    %53 = arith.addf %51, %52 : vector<32x48xf32>
    %cst_17 = arith.constant dense<0xFF800000> : vector<32xf32>
    %54 = vector.multi_reduction <maximumf>, %53, %cst_17 [1] : vector<32x48xf32> to vector<32xf32>
    %55 = vector.shape_cast %54 : vector<32xf32> to vector<32x1xf32>
    %56 = vector.broadcast %55 : vector<32x1xf32> to vector<32x48xf32>
    %57 = arith.subf %53, %56 : vector<32x48xf32>
    %58 = math.exp %57 : vector<32x48xf32>
    %cst_18 = arith.constant dense<0.000000e+00> : vector<32xf32>
    %59 = vector.multi_reduction <add>, %58, %cst_18 [1] : vector<32x48xf32> to vector<32xf32>
    %60 = vector.shape_cast %59 : vector<32xf32> to vector<32x1xf32>
    %61 = vector.broadcast %60 : vector<32x1xf32> to vector<32x48xf32>
    %62 = arith.divf %58, %61 : vector<32x48xf32>
    %cst_19 = arith.constant dense<0.000000e+00> : vector<32x4xf32>
    %63 = tpu.matmul %62, %49, %cst_19 {dimension_numbers = #tpu.dot_dimension_numbers<[1], [0], [0], [1], [0, 0, 1, 1], [], []>} : vector<32x48xf32>, vector<48x4xf32>, vector<32x4xf32> -> vector<32x4xf32>
    %c0_20 = arith.constant 0 : index
    %c0_21 = arith.constant 0 : index
    %c0_22 = arith.constant 0 : index
    %64 = vector.load %arg7[%c0_20, %c0_21, %c0_22] : memref<4x32x32xf32, #tpu.memory_space<vmem>>, vector<1x32x32xf32>
    %65 = vector.shape_cast %64 : vector<1x32x32xf32> to vector<32x32xf32>
    %66 = vector.extract_strided_slice %63 {offsets = [0, 0], sizes = [32, 1], strides = [1, 1]} : vector<32x4xf32> to vector<32x1xf32>
    %67 = vector.broadcast %66 : vector<32x1xf32> to vector<32x32xf32>
    %68 = arith.mulf %65, %67 : vector<32x32xf32>
    %c1 = arith.constant 1 : index
    %c0_23 = arith.constant 0 : index
    %c0_24 = arith.constant 0 : index
    %69 = vector.load %arg7[%c1, %c0_23, %c0_24] : memref<4x32x32xf32, #tpu.memory_space<vmem>>, vector<1x32x32xf32>
    %70 = vector.shape_cast %69 : vector<1x32x32xf32> to vector<32x32xf32>
    %71 = vector.extract_strided_slice %63 {offsets = [0, 1], sizes = [32, 1], strides = [1, 1]} : vector<32x4xf32> to vector<32x1xf32>
    %72 = vector.broadcast %71 : vector<32x1xf32> to vector<32x32xf32>
    %73 = arith.mulf %70, %72 : vector<32x32xf32>
    %74 = arith.addf %68, %73 : vector<32x32xf32>
    %c2 = arith.constant 2 : index
    %c0_25 = arith.constant 0 : index
    %c0_26 = arith.constant 0 : index
    %75 = vector.load %arg7[%c2, %c0_25, %c0_26] : memref<4x32x32xf32, #tpu.memory_space<vmem>>, vector<1x32x32xf32>
    %76 = vector.shape_cast %75 : vector<1x32x32xf32> to vector<32x32xf32>
    %77 = vector.extract_strided_slice %63 {offsets = [0, 2], sizes = [32, 1], strides = [1, 1]} : vector<32x4xf32> to vector<32x1xf32>
    %78 = vector.broadcast %77 : vector<32x1xf32> to vector<32x32xf32>
    %79 = arith.mulf %76, %78 : vector<32x32xf32>
    %80 = arith.addf %74, %79 : vector<32x32xf32>
    %c3 = arith.constant 3 : index
    %c0_27 = arith.constant 0 : index
    %c0_28 = arith.constant 0 : index
    %81 = vector.load %arg7[%c3, %c0_27, %c0_28] : memref<4x32x32xf32, #tpu.memory_space<vmem>>, vector<1x32x32xf32>
    %82 = vector.shape_cast %81 : vector<1x32x32xf32> to vector<32x32xf32>
    %83 = vector.extract_strided_slice %63 {offsets = [0, 3], sizes = [32, 1], strides = [1, 1]} : vector<32x4xf32> to vector<32x1xf32>
    %84 = vector.broadcast %83 : vector<32x1xf32> to vector<32x32xf32>
    %85 = arith.mulf %82, %84 : vector<32x32xf32>
    %86 = arith.addf %80, %85 : vector<32x32xf32>
    %87 = arith.truncf %86 : vector<32x32xf32> to vector<32x32xbf16>
    %88 = arith.truncf %29 : vector<32x32xf32> to vector<32x32xbf16>
    %cst_29 = arith.constant dense<0.000000e+00> : vector<32x32xf32>
    %89 = tpu.matmul %87, %88, %cst_29 {dimension_numbers = #tpu.dot_dimension_numbers<[1], [0], [0], [1], [0, 0, 1, 1], [], []>} : vector<32x32xbf16>, vector<32x32xbf16>, vector<32x32xf32> -> vector<32x32xf32>
    %c0_30 = arith.constant 0 : index
    %c0_31 = arith.constant 0 : index
    %90 = vector.load %arg9[%c0_30, %c0_31] : memref<32x32xf32, #tpu.memory_space<vmem>>, vector<32x32xf32>
    tpu.vector_store %arg9[%c0_30, %c0_31], %89 {strides = array<i32>} : memref<32x32xf32, #tpu.memory_space<vmem>>, vector<32x32xf32>,
    %c0_32 = arith.constant 0 : index
    %c0_33 = arith.constant 0 : index
    %91 = vector.load %arg8[%c0_32, %c0_33] : memref<8x32xbf16, #tpu.memory_space<vmem>>, vector<8x32xbf16>
    %92 = arith.truncf %89 : vector<32x32xf32> to vector<32x32xbf16>
    %cst_34 = arith.constant dense<0.000000e+00> : vector<8x32xf32>
    %93 = tpu.matmul %91, %92, %cst_34 {dimension_numbers = #tpu.dot_dimension_numbers<[1], [0], [0], [1], [0, 0, 1, 1], [], []>} : vector<8x32xbf16>, vector<32x32xbf16>, vector<8x32xf32> -> vector<8x32xf32>
    %c0_35 = arith.constant 0 : index
    %c0_36 = arith.constant 0 : index
    %94 = vector.load %arg10[%c0_35, %c0_36] : memref<8x32xf32, #tpu.memory_space<vmem>>, vector<8x32xf32>
    tpu.vector_store %arg10[%c0_35, %c0_36], %93 {strides = array<i32>} : memref<8x32xf32, #tpu.memory_space<vmem>>, vector<8x32xf32>,
    return
  }
}

</mosaic_0001>

<llo_original>
// kernel: gbst_forward.1
$region0: #{gbst_forward.1}
  #allocation0 [shape = 'u32[]', space=smem, size = 0x4, offset = 0x4, fixed_abs, tag = 'smem constant byte address 0x4 - core index']
  #allocation1 [shape = 'u32[144,128]{1,0:T(1,128)}', space=vmem, size = 0x12000, scoped, tag = 'internal scratch']
  #allocation2 [shape = 'f32[1,1]{1,0:T(1,128)S(1)}', space=vmem, size = 0x200, scoped, tag = 'scoped memory for gbst_forward.1']
  %s0 = inlined_call_operand.vmem [shape: s32[32,4], index: 0, kind: input, shape index: {}]
  %s1 = inlined_call_operand.vmem [shape: bf16[64,33], index: 1, kind: input, shape index: {}]
  %s2 = inlined_call_operand.vmem [shape: f32[1,33], index: 2, kind: input, shape index: {}]
  %s3 = inlined_call_operand.<no memory space> [shape: f32[1,1], index: 3, kind: input, shape index: {}]
  %s4 = inlined_call_operand.vmem [shape: bf16[48,128], index: 4, kind: input, shape index: {}]
  %s5 = inlined_call_operand.vmem [shape: f32[128,4], index: 5, kind: input, shape index: {}]
  %s6 = inlined_call_operand.vmem [shape: f32[32,48], index: 6, kind: input, shape index: {}]
  %s7 = inlined_call_operand.vmem [shape: f32[4,32,32], index: 7, kind: input, shape index: {}]
  %s8 = inlined_call_operand.vmem [shape: bf16[8,32], index: 8, kind: input, shape index: {}]
  %s9 = inlined_call_operand.hbm [shape: f32[32,32], index: 9, kind: output, shape index: {0}]
  %s10 = inlined_call_operand.hbm [shape: f32[8,32], index: 10, kind: output, shape index: {1}]
  %11 = xla_tuple %s9, %s10
  %s12 = sld [smem:[#allocation0]]
  $region54: #{gbst_forward.1} parent=0
    _
  %s14 = ssub.s32 1, %s12
  %s15 = scalar_select 0, %s14, %s12
  %v16 = vstv %s3
  %17 = vst [vmem:[#allocation2] sm:$0x1] %v16
  $region1: #{gbst_forward.1} parent=0
    #allocation3 [shape = 'u8[16384]{0}', space=vmem, size = 0x4000, scoped, tag = 'output window, operand 0, single buffered']
    #allocation4 [shape = 's32[1]{0}', space=sflag, size = 0x4, scoped, tag = 'scoped memory for gbst_forward.1']
    #allocation5 [shape = 'u8[4096]{0}', space=vmem, size = 0x1000, scoped, tag = 'output window, operand 1, single buffered']
    #allocation6 [shape = 's32[1]{0}', space=sflag, size = 0x4, scoped, tag = 'scoped memory for gbst_forward.1']
    %18 = vsyncpa [#allocation4], 0
    %19 = vsyncpa [#allocation6], 0
    // Predicated region
    $region2: #{gbst_forward.1} parent=1 // pred_check
      _
    $region3: #{gbst_forward.1} parent=1 // pred_check_branch
      %21 = sbr.rel (0) target = $region5
    $region4: #{gbst_forward.1} parent=1 // pred_region
      _
    $region5: #{gbst_forward.1} parent=1 // pred_fallthru
      _
    // Predicated region
    $region6: #{gbst_forward.1} parent=1 // pred_check
      _
    $region7: #{gbst_forward.1} parent=1 // pred_check_branch
      %23 = sbr.rel (0) target = $region9
    $region8: #{gbst_forward.1} parent=1 // pred_region
      _
    $region9: #{gbst_forward.1} parent=1 // pred_fallthru
      _
    // Predicated region
    $region10: #{gbst_forward.1} parent=1 // pred_check
      _
    $region11: #{gbst_forward.1} parent=1 // pred_check_branch
      %25 = sbr.rel (0) target = $region13
    $region12: #{gbst_forward.1} parent=1 // pred_region
      _
    $region13: #{gbst_forward.1} parent=1 // pred_fallthru
      _
    // Predicated region
    $region14: #{gbst_forward.1} parent=1 // pred_check
      _
    $region15: #{gbst_forward.1} parent=1 // pred_check_branch
      %27 = sbr.rel (0) target = $region17
    $region16: #{gbst_forward.1} parent=1 // pred_region
      _
    $region17: #{gbst_forward.1} parent=1 // pred_fallthru
      _
    // Predicated region
    $region18: #{gbst_forward.1} parent=1 // pred_check
      _
    $region19: #{gbst_forward.1} parent=1 // pred_check_branch
      %29 = sbr.rel (0) target = $region21
    $region20: #{gbst_forward.1} parent=1 // pred_region
      _
    $region21: #{gbst_forward.1} parent=1 // pred_fallthru
      _
    // Predicated region
    $region22: #{gbst_forward.1} parent=1 // pred_check
      _
    $region23: #{gbst_forward.1} parent=1 // pred_check_branch
      %31 = sbr.rel (0) target = $region25
    $region24: #{gbst_forward.1} parent=1 // pred_region
      _
    $region25: #{gbst_forward.1} parent=1 // pred_fallthru
      _
    // Predicated region
    $region26: #{gbst_forward.1} parent=1 // pred_check
      _
    $region27: #{gbst_forward.1} parent=1 // pred_check_branch
      %33 = sbr.rel (0) target = $region29
    $region28: #{gbst_forward.1} parent=1 // pred_region
      _
    $region29: #{gbst_forward.1} parent=1 // pred_fallthru
      _
    // Predicated region
    $region30: #{gbst_forward.1} parent=1 // pred_check
      _
    $region31: #{gbst_forward.1} parent=1 // pred_check_branch
      %35 = sbr.rel (0) target = $region33
    $region32: #{gbst_forward.1} parent=1 // pred_region
      _
    $region33: #{gbst_forward.1} parent=1 // pred_fallthru
      _
    // Predicated region
    $region34: #{gbst_forward.1} parent=1 // pred_check
      _
    $region35: #{gbst_forward.1} parent=1 // pred_check_branch
      %37 = sbr.rel (0) target = $region37
    $region36: #{gbst_forward.1} parent=1 // pred_region
      _
    $region37: #{gbst_forward.1} parent=1 // pred_fallthru
      _
    %v39 = vld [vmem:[%s0] sm:$0xff]
    %v40 = vld [vmem:[%s0 + $0x8] sm:$0xff]
    %v41 = vld [vmem:[%s0 + $0x10] sm:$0xff]
    %v42 = vld [vmem:[%s0 + $0x18] sm:$0xff]
    %v43 = vlaneseq
    %v44 = vand.u32 %v43, 127
    %45 = vset.pattern.permute.xlu0 0
    %46 = vperm.xlu0 %45, %v39
    %v47 = vpop.permute.xlu0 %46
    %48 = vset.pattern.permute.xlu0 0
    %49 = vperm.xlu0 %48, %v40
    %v50 = vpop.permute.xlu0 %49
    %51 = vset.pattern.permute.xlu0 0
    %52 = vperm.xlu0 %51, %v41
    %v53 = vpop.permute.xlu0 %52
    %54 = vset.pattern.permute.xlu0 0
    %55 = vperm.xlu0 %54, %v42
    %v56 = vpop.permute.xlu0 %55
    %vm57 = vcmp.eq.s32.totalorder %v47, %v44
    %vm58 = vcmp.eq.s32.totalorder %v50, %v44
    %vm59 = vcmp.eq.s32.totalorder %v53, %v44
    %vm60 = vcmp.eq.s32.totalorder %v56, %v44
    %v61 = vsel %vm57, 1, 0
    %v62 = vsel %vm58, 1, 0
    %v63 = vsel %vm59, 1, 0
    %v64 = vsel %vm60, 1, 0
    %v65 = vcvt.s32.f32 %v61
    %v66 = vcvt.s32.f32 %v62
    %v67 = vcvt.s32.f32 %v63
    %v68 = vcvt.s32.f32 %v64
    %69 = vset.pattern.permute.xlu0 1
    %70 = vperm.xlu0 %69, %v39
    %v71 = vpop.permute.xlu0 %70
    %72 = vset.pattern.permute.xlu0 1
    %73 = vperm.xlu0 %72, %v40
    %v74 = vpop.permute.xlu0 %73
    %75 = vset.pattern.permute.xlu0 1
    %76 = vperm.xlu0 %75, %v41
    %v77 = vpop.permute.xlu0 %76
    %78 = vset.pattern.permute.xlu0 1
    %79 = vperm.xlu0 %78, %v42
    %v80 = vpop.permute.xlu0 %79
    %vm81 = vcmp.eq.s32.totalorder %v71, %v44
    %vm82 = vcmp.eq.s32.totalorder %v74, %v44
    %vm83 = vcmp.eq.s32.totalorder %v77, %v44
    %vm84 = vcmp.eq.s32.totalorder %v80, %v44
    %v85 = vsel %vm81, 1, 0
    %v86 = vsel %vm82, 1, 0
    %v87 = vsel %vm83, 1, 0
    %v88 = vsel %vm84, 1, 0
    %v89 = vcvt.s32.f32 %v85
    %v90 = vcvt.s32.f32 %v86
    %v91 = vcvt.s32.f32 %v87
    %v92 = vcvt.s32.f32 %v88
    %93 = vset.pattern.permute.xlu0 2
    %94 = vperm.xlu0 %93, %v39
    %v95 = vpop.permute.xlu0 %94
    %96 = vset.pattern.permute.xlu0 2
    %97 = vperm.xlu0 %96, %v40
    %v98 = vpop.permute.xlu0 %97
    %99 = vset.pattern.permute.xlu0 2
    %100 = vperm.xlu0 %99, %v41
    %v101 = vpop.permute.xlu0 %100
    %102 = vset.pattern.permute.xlu0 2
    %103 = vperm.xlu0 %102, %v42
    %v104 = vpop.permute.xlu0 %103
    %vm105 = vcmp.eq.s32.totalorder %v95, %v44
    %vm106 = vcmp.eq.s32.totalorder %v98, %v44
    %vm107 = vcmp.eq.s32.totalorder %v101, %v44
    %vm108 = vcmp.eq.s32.totalorder %v104, %v44
    %v109 = vsel %vm105, 1, 0
    %v110 = vsel %vm106, 1, 0
    %v111 = vsel %vm107, 1, 0
    %v112 = vsel %vm108, 1, 0
    %v113 = vcvt.s32.f32 %v109
    %v114 = vcvt.s32.f32 %v110
    %v115 = vcvt.s32.f32 %v111
    %v116 = vcvt.s32.f32 %v112
    %117 = vset.pattern.permute.xlu0 3
    %118 = vperm.xlu0 %117, %v39
    %v119 = vpop.permute.xlu0 %118
    %120 = vset.pattern.permute.xlu0 3
    %121 = vperm.xlu0 %120, %v40
    %v122 = vpop.permute.xlu0 %121
    %123 = vset.pattern.permute.xlu0 3
    %124 = vperm.xlu0 %123, %v41
    %v125 = vpop.permute.xlu0 %124
    %126 = vset.pattern.permute.xlu0 3
    %127 = vperm.xlu0 %126, %v42
    %v128 = vpop.permute.xlu0 %127
    %vm129 = vcmp.eq.s32.totalorder %v119, %v44
    %vm130 = vcmp.eq.s32.totalorder %v122, %v44
    %vm131 = vcmp.eq.s32.totalorder %v125, %v44
    %vm132 = vcmp.eq.s32.totalorder %v128, %v44
    %v133 = vsel %vm129, 1, 0
    %v134 = vsel %vm130, 1, 0
    %v135 = vsel %vm131, 1, 0
    %v136 = vsel %vm132, 1, 0
    %v137 = vcvt.s32.f32 %v133
    %v138 = vcvt.s32.f32 %v134
    %v139 = vcvt.s32.f32 %v135
    %v140 = vcvt.s32.f32 %v136
    %145 = vrot.lane.b32.xlu0 %v89, 16
    %v146 = vpop.permute.xlu0 %145
    %147 = vrot.lane.b32.xlu0 %v90, 16
    %v148 = vpop.permute.xlu0 %147
    %149 = vrot.lane.b32.xlu0 %v91, 16
    %v150 = vpop.permute.xlu0 %149
    %151 = vrot.lane.b32.xlu0 %v92, 16
    %v152 = vpop.permute.xlu0 %151
    %161 = vrot.lane.b32.xlu0 %v113, 32
    %v162 = vpop.permute.xlu0 %161
    %163 = vrot.lane.b32.xlu0 %v114, 32
    %v164 = vpop.permute.xlu0 %163
    %165 = vrot.lane.b32.xlu0 %v115, 32
    %v166 = vpop.permute.xlu0 %165
    %167 = vrot.lane.b32.xlu0 %v116, 32
    %v168 = vpop.permute.xlu0 %167
    %177 = vrot.lane.b32.xlu0 %v137, 48
    %v178 = vpop.permute.xlu0 %177
    %179 = vrot.lane.b32.xlu0 %v138, 48
    %v180 = vpop.permute.xlu0 %179
    %181 = vrot.lane.b32.xlu0 %v139, 48
    %v182 = vpop.permute.xlu0 %181
    %183 = vrot.lane.b32.xlu0 %v140, 48
    %v184 = vpop.permute.xlu0 %183
    %vm189 = vcmask 130048
    %v190 = vsel %vm189, %v65, %v146
    %v191 = vsel %vm189, %v66, %v148
    %v192 = vsel %vm189, %v67, %v150
    %v193 = vsel %vm189, %v68, %v152
    %vm194 = vcmask 261120
    %v195 = vsel %vm194, %v190, %v162
    %v196 = vsel %vm194, %v191, %v164
    %v197 = vsel %vm194, %v192, %v166
    %v198 = vsel %vm194, %v193, %v168
    %vm199 = vcmask 392192
    %v200 = vsel %vm199, %v195, %v178
    %v201 = vsel %vm199, %v196, %v180
    %v202 = vsel %vm199, %v197, %v182
    %v203 = vsel %vm199, %v198, %v184
    %v204 = vpack.c.bf16 %v201, %v200
    %v205 = vpack.c.bf16 %v203, %v202
    %v206 = vld [vmem:[%s1] sm:$0xf]
    %v207 = vld [vmem:[%s1 + $0x4] sm:$0xf]
    %v208 = vld [vmem:[%s1 + $0x8] sm:$0xf]
    %v209 = vld [vmem:[%s1 + $0xc] sm:$0xf]
    %v210 = vld [vmem:[%s1 + $0x10] sm:$0xf]
    %v211 = vld [vmem:[%s1 + $0x14] sm:$0xf]
    %v212 = vld [vmem:[%s1 + $0x18] sm:$0xf]
    %v213 = vld [vmem:[%s1 + $0x1c] sm:$0xf]
    %v214 = vld [vmem:[%s2] sm:$0x1]
    %v216 = vlaneseq
    %v217 = vshrl.u32 %v216, 7
    %v218 = vsub.s32 0, %v217
    %v219 = vrot.slane %v214, %v218
    %v229 = vunpack.c.l.b16 %v206
    %v230 = vunpack.c.l.b16 %v207
    %v231 = vunpack.c.l.b16 %v208
    %v232 = vunpack.c.l.b16 %v209
    %v233 = vunpack.c.l.b16 %v210
    %v234 = vunpack.c.l.b16 %v211
    %v235 = vunpack.c.l.b16 %v212
    %v236 = vunpack.c.l.b16 %v213
    %v237 = vpack.c.b16 %v230, %v229
    %v238 = vpack.c.b16 %v232, %v231
    %v239 = vpack.c.b16 %v234, %v233
    %v240 = vpack.c.b16 %v236, %v235
    %vm245 = vcmask 523264
    %v247 = vsel %vm245, %v204, 0
    %v250 = vsel %vm245, %v205, 0
    %252 = vmatprep.subr.bf16.mxu0 0
    %253 = vmatpush1.bf16.msra.mxu0 %v237
    %254 = vmatprep.subr.bf16.mxu0 0
    %255 = vmatpush1.bf16.msra.mxu0 %v238
    %256 = vmatprep.subr.bf16.mxu0 0
    %257 = vmatpush1.bf16.msra.mxu0 %v239
    %258 = vmatprep.subr.bf16.mxu0 0
    %259 = vmatpush1.bf16.msra.mxu0 %v240
    %260 = vmatprep.subr.bf16.mxu0 0
    %261 = vmatpush1.bf16.msra.mxu0 0
    %262 = vmatprep.subr.bf16.mxu0 0
    %263 = vmatpush1.bf16.msra.mxu0 0
    %264 = vmatprep.subr.bf16.mxu0 0
    %265 = vmatpush1.bf16.msra.mxu0 0
    %266 = vmatprep.subr.bf16.mxu0 0
    %267 = vmatpush1.bf16.msra.mxu0 0
    %268 = vmatprep.subr.bf16.mxu0 0
    %269 = vmatpush1.bf16.msra.mxu0 0
    %270 = vmatprep.subr.bf16.mxu0 0
    %271 = vmatpush1.bf16.msra.mxu0 0
    %272 = vmatprep.subr.bf16.mxu0 0
    %273 = vmatpush1.bf16.msra.mxu0 0
    %274 = vmatprep.subr.bf16.mxu0 0
    %275 = vmatpush1.bf16.msra.mxu0 0
    %276 = vmatprep.subr.bf16.mxu0 0
    %277 = vmatpush1.bf16.msra.mxu0 0
    %278 = vmatprep.subr.bf16.mxu0 0
    %279 = vmatpush1.bf16.msra.mxu0 0
    %280 = vmatprep.subr.bf16.mxu0 0
    %281 = vmatpush1.bf16.msra.mxu0 0
    %282 = vmatprep.subr.bf16.mxu0 0
    %283 = vmatpush1.bf16.msra.mxu0 0
    %284 = vmatprep.mubr.bf16.mxu0 0
    %285 = vmatmul.mubr.bf16.gmra.mrb[0].mxu0 %v247
    %v286 = vpop.f32.mrb[0].mxu0
    %v287 = vadd.f32 %v219, %v286
    %v288 = vpop.f32.mrb[0].mxu0
    %v289 = vpop.f32.mrb[0].mxu0
    %v290 = vadd.f32 %v219, %v289
    %v291 = vpop.f32.mrb[0].mxu0
    %292 = vmatprep.mubr.bf16.mxu0 0
    %293 = vmatmul.mubr.bf16.gmra.mrb[0].mxu0 %v250
    %v294 = vpop.f32.mrb[0].mxu0
    %v295 = vadd.f32 %v219, %v294
    %v296 = vpop.f32.mrb[0].mxu0
    %v297 = vpop.f32.mrb[0].mxu0
    %v298 = vadd.f32 %v219, %v297
    %v299 = vpop.f32.mrb[0].mxu0
    %300 = vdwg.mxu0
    %v301 = vld [vmem:[%s5] sm:$0xff]
    %v302 = vld [vmem:[%s5 + $0x8] sm:$0xff]
    %v303 = vld [vmem:[%s5 + $0x10] sm:$0xff]
    %v304 = vld [vmem:[%s5 + $0x18] sm:$0xff]
    %v305 = vld [vmem:[%s5 + $0x20] sm:$0xff]
    %v306 = vld [vmem:[%s5 + $0x28] sm:$0xff]
    %v307 = vld [vmem:[%s5 + $0x30] sm:$0xff]
    %v308 = vld [vmem:[%s5 + $0x38] sm:$0xff]
    %v309 = vld [vmem:[%s5 + $0x40] sm:$0xff]
    %v310 = vld [vmem:[%s5 + $0x48] sm:$0xff]
    %v311 = vld [vmem:[%s5 + $0x50] sm:$0xff]
    %v312 = vld [vmem:[%s5 + $0x58] sm:$0xff]
    %v313 = vld [vmem:[%s5 + $0x60] sm:$0xff]
    %v314 = vld [vmem:[%s5 + $0x68] sm:$0xff]
    %v315 = vld [vmem:[%s5 + $0x70] sm:$0xff]
    %v316 = vld [vmem:[%s5 + $0x78] sm:$0xff]
    %318 = vset.pattern.permute.xlu0 32
    %319 = vperm.xlu0 %318, %v287
    %v320 = vpop.permute.xlu0 %319
    %323 = vset.pattern.permute.xlu0 32
    %324 = vperm.xlu0 %323, %v290
    %v325 = vpop.permute.xlu0 %324
    %328 = vset.pattern.permute.xlu0 32
    %329 = vperm.xlu0 %328, %v295
    %v330 = vpop.permute.xlu0 %329
    %333 = vset.pattern.permute.xlu0 32
    %334 = vperm.xlu0 %333, %v298
    %v335 = vpop.permute.xlu0 %334
    %v337 = vmul.f32 %v320, %v301
    %v338 = vmul.f32 %v325, %v302
    %v339 = vmul.f32 %v330, %v303
    %v340 = vmul.f32 %v335, %v304
    %v341 = vmul.f32 %v320, %v305
    %v342 = vmul.f32 %v325, %v306
    %v343 = vmul.f32 %v330, %v307
    %v344 = vmul.f32 %v335, %v308
    %v345 = vmul.f32 %v320, %v309
    %v346 = vmul.f32 %v325, %v310
    %v347 = vmul.f32 %v330, %v311
    %v348 = vmul.f32 %v335, %v312
    %v349 = vmul.f32 %v320, %v313
    %v350 = vmul.f32 %v325, %v314
    %v351 = vmul.f32 %v330, %v315
    %v352 = vmul.f32 %v335, %v316
    %v353 = vpack.c.bf16 %v338, %v337
    %v354 = vpack.c.bf16 %v340, %v339
    %v355 = vpack.c.bf16 %v342, %v341
    %v356 = vpack.c.bf16 %v344, %v343
    %v357 = vpack.c.bf16 %v346, %v345
    %v358 = vpack.c.bf16 %v348, %v347
    %v359 = vpack.c.bf16 %v350, %v349
    %v360 = vpack.c.bf16 %v352, %v351
    %v361 = vld [vmem:[%s4] sm:$0xf]
    %v362 = vld [vmem:[%s4 + $0x4] sm:$0xf]
    %v363 = vld [vmem:[%s4 + $0x8] sm:$0xf]
    %v364 = vld [vmem:[%s4 + $0xc] sm:$0xf]
    %v365 = vld [vmem:[%s4 + $0x10] sm:$0xf]
    %v366 = vld [vmem:[%s4 + $0x14] sm:$0xf]
    %v367 = vld [vmem:[#allocation2] sm:$0x1]
    %v369 = vlaneseq
    %v370 = vshrl.u32 %v369, 7
    %v371 = vsub.s32 0, %v370
    %v372 = vrot.slane %v367, %v371
    %373 = vset.pattern.permute.xlu0 0
    %374 = vperm.xlu0 %373, %v372
    %v375 = vpop.permute.xlu0 %374
    %v383 = vunpack.c.l.b16 %v361
    %v384 = vunpack.c.l.b16 %v362
    %v385 = vunpack.c.l.b16 %v363
    %v386 = vunpack.c.l.b16 %v364
    %v387 = vunpack.c.l.b16 %v365
    %v388 = vunpack.c.l.b16 %v366
    %v389 = vpack.c.b16 %v384, %v383
    %v390 = vpack.c.b16 %v386, %v385
    %v391 = vpack.c.b16 %v388, %v387
    %395 = vmatprep.subr.bf16.mxu0 0
    %396 = vmatpush1.bf16.msra.mxu0 %v353
    %397 = vmatprep.subr.bf16.mxu0 0
    %398 = vmatpush1.bf16.msra.mxu0 %v354
    %399 = vmatprep.subr.bf16.mxu0 0
    %400 = vmatpush1.bf16.msra.mxu0 %v355
    %401 = vmatprep.subr.bf16.mxu0 0
    %402 = vmatpush1.bf16.msra.mxu0 %v356
    %403 = vmatprep.subr.bf16.mxu0 0
    %404 = vmatpush1.bf16.msra.mxu0 %v357
    %405 = vmatprep.subr.bf16.mxu0 0
    %406 = vmatpush1.bf16.msra.mxu0 %v358
    %407 = vmatprep.subr.bf16.mxu0 0
    %408 = vmatpush1.bf16.msra.mxu0 %v359
    %409 = vmatprep.subr.bf16.mxu0 0
    %410 = vmatpush1.bf16.msra.mxu0 %v360
    %411 = vmatprep.subr.bf16.mxu0 0
    %412 = vmatpush1.bf16.msra.mxu0 0
    %413 = vmatprep.subr.bf16.mxu0 0
    %414 = vmatpush1.bf16.msra.mxu0 0
    %415 = vmatprep.subr.bf16.mxu0 0
    %416 = vmatpush1.bf16.msra.mxu0 0
    %417 = vmatprep.subr.bf16.mxu0 0
    %418 = vmatpush1.bf16.msra.mxu0 0
    %419 = vmatprep.subr.bf16.mxu0 0
    %420 = vmatpush1.bf16.msra.mxu0 0
    %421 = vmatprep.subr.bf16.mxu0 0
    %422 = vmatpush1.bf16.msra.mxu0 0
    %423 = vmatprep.subr.bf16.mxu0 0
    %424 = vmatpush1.bf16.msra.mxu0 0
    %425 = vmatprep.subr.bf16.mxu0 0
    %426 = vmatpush1.bf16.msra.mxu0 0
    %427 = vmatprep.mubr.bf16.mxu0 0
    %428 = vmatmul.mubr.bf16.gmra.mrb[0].mxu0 %v389
    %v429 = vpop.f32.mrb[0].mxu0
    %v430 = vadd.f32 %v375, %v429
    %v431 = vpop.f32.mrb[0].mxu0
    %v432 = vpop.f32.mrb[0].mxu0
    %v433 = vadd.f32 %v375, %v432
    %v434 = vpop.f32.mrb[0].mxu0
    %435 = vmatprep.mubr.bf16.mxu0 0
    %436 = vmatmul.mubr.bf16.gmra.mrb[0].mxu0 %v390
    %v437 = vpop.f32.mrb[0].mxu0
    %v438 = vadd.f32 %v375, %v437
    %v439 = vpop.f32.mrb[0].mxu0
    %v440 = vpop.f32.mrb[0].mxu0
    %v441 = vadd.f32 %v375, %v440
    %v442 = vpop.f32.mrb[0].mxu0
    %443 = vmatprep.mubr.bf16.mxu0 0
    %444 = vmatmul.mubr.bf16.gmra.mrb[0].mxu0 %v391
    %v445 = vpop.f32.mrb[0].mxu0
    %v446 = vadd.f32 %v375, %v445
    %v447 = vpop.f32.mrb[0].mxu0
    %v448 = vpop.f32.mrb[0].mxu0
    %v449 = vadd.f32 %v375, %v448
    %v450 = vpop.f32.mrb[0].mxu0
    %451 = vdwg.mxu0
    %vm452 = vcmask 31744
    %v453 = vsel %vm452, %v430, -inf
    %454 = vmax.xlane.f32.xlu0 %v453
    %v455 = vpop.xlane.xlu0 %454
    %v456 = vsel %vm452, %v433, -inf
    %457 = vmax.xlane.f32.xlu0 %v456
    %v458 = vpop.xlane.xlu0 %457
    %v459 = vsel %vm452, %v438, -inf
    %460 = vmax.xlane.f32.xlu0 %v459
    %v461 = vpop.xlane.xlu0 %460
    %v462 = vsel %vm452, %v441, -inf
    %463 = vmax.xlane.f32.xlu0 %v462
    %v464 = vpop.xlane.xlu0 %463
    %v465 = vsel %vm452, %v446, -inf
    %466 = vmax.xlane.f32.xlu0 %v465
    %v467 = vpop.xlane.xlu0 %466
    %v468 = vsel %vm452, %v449, -inf
    %469 = vmax.xlane.f32.xlu0 %v468
    %v470 = vpop.xlane.xlu0 %469
    %v471 = vsub.f32 %v430, %v455
    %v472 = vsub.f32 %v433, %v458
    %v473 = vsub.f32 %v438, %v461
    %v474 = vsub.f32 %v441, %v464
    %v475 = vsub.f32 %v446, %v467
    %v476 = vsub.f32 %v449, %v470
    %v477 = vmul.f32 %v471, 1.442695
    %v478 = vpow.pop %v477
    %v479 = vmul.f32 %v472, 1.442695
    %v480 = vpow.pop %v479
    %v481 = vmul.f32 %v473, 1.442695
    %v482 = vpow.pop %v481
    %v483 = vmul.f32 %v474, 1.442695
    %v484 = vpow.pop %v483
    %v485 = vmul.f32 %v475, 1.442695
    %v486 = vpow.pop %v485
    %v487 = vmul.f32 %v476, 1.442695
    %v488 = vpow.pop %v487
    %v489 = vsel %vm452, %v478, 0.0
    %490 = vadd.xlane.f32.xlu0 %v489
    %v491 = vpop.xlane.xlu0 %490
    %v492 = vsel %vm452, %v480, 0.0
    %493 = vadd.xlane.f32.xlu0 %v492
    %v494 = vpop.xlane.xlu0 %493
    %v495 = vsel %vm452, %v482, 0.0
    %496 = vadd.xlane.f32.xlu0 %v495
    %v497 = vpop.xlane.xlu0 %496
    %v498 = vsel %vm452, %v484, 0.0
    %499 = vadd.xlane.f32.xlu0 %v498
    %v500 = vpop.xlane.xlu0 %499
    %v501 = vsel %vm452, %v486, 0.0
    %502 = vadd.xlane.f32.xlu0 %v501
    %v503 = vpop.xlane.xlu0 %502
    %v504 = vsel %vm452, %v488, 0.0
    %505 = vadd.xlane.f32.xlu0 %v504
    %v506 = vpop.xlane.xlu0 %505
    %v507 = vrcp.pop %v491
    %v508 = vmul.f32 %v478, %v507
    %v509 = vrcp.pop %v494
    %v510 = vmul.f32 %v480, %v509
    %v511 = vrcp.pop %v497
    %v512 = vmul.f32 %v482, %v511
    %v513 = vrcp.pop %v500
    %v514 = vmul.f32 %v484, %v513
    %v515 = vrcp.pop %v503
    %v516 = vmul.f32 %v486, %v515
    %v517 = vrcp.pop %v506
    %v518 = vmul.f32 %v488, %v517
    %v519 = vld [vmem:[%s6] sm:$0xff]
    %v520 = vld [vmem:[%s6 + $0x8] sm:$0xff]
    %v521 = vld [vmem:[%s6 + $0x10] sm:$0xff]
    %v522 = vld [vmem:[%s6 + $0x18] sm:$0xff]
    %v524 = vsel %vm452, %v508, 0
    %v527 = vsel %vm452, %v510, 0
    %v530 = vsel %vm452, %v512, 0
    %v533 = vsel %vm452, %v514, 0
    %v536 = vsel %vm452, %v516, 0
    %v539 = vsel %vm452, %v518, 0
    %541 = vmatprep.subr.mxu0 0.0
    %542 = vmatpush1.xpose.msra.mxu0 %v524
    %543 = vmatprep.subr.mxu0 0.0
    %544 = vmatpush1.xpose.msra.mxu0 %v527
    %545 = vmatprep.subr.mxu0 0.0
    %546 = vmatpush1.xpose.msra.mxu0 %v530
    %547 = vmatprep.subr.mxu0 0.0
    %548 = vmatpush1.xpose.msra.mxu0 %v533
    %549 = vmatprep.subr.mxu0 0.0
    %550 = vmatpush1.xpose.msra.mxu0 %v536
    %551 = vmatprep.subr.mxu0 0.0
    %552 = vmatpush1.xpose.msra.mxu0 %v539
    %553 = vmatprep.subr.mxu0 0.0
    %554 = vmatpush1.xpose.msra.mxu0 0.0
    %555 = vmatprep.subr.mxu0 0.0
    %556 = vmatpush1.xpose.msra.mxu0 0.0
    %557 = vmatprep.subr.mxu0 0.0
    %558 = vmatpush1.xpose.msra.mxu0 0.0
    %559 = vmatprep.subr.mxu0 0.0
    %560 = vmatpush1.xpose.msra.mxu0 0.0
    %561 = vmatprep.subr.mxu0 0.0
    %562 = vmatpush1.xpose.msra.mxu0 0.0
    %563 = vmatprep.subr.mxu0 0.0
    %564 = vmatpush1.xpose.msra.mxu0 0.0
    %565 = vmatprep.subr.mxu0 0.0
    %566 = vmatpush1.xpose.msra.mxu0 0.0
    %567 = vmatprep.subr.mxu0 0.0
    %568 = vmatpush1.xpose.msra.mxu0 0.0
    %569 = vmatprep.subr.mxu0 0.0
    %570 = vmatpush1.xpose.msra.mxu0 0.0
    %571 = vmatprep.subr.mxu0 0.0
    %572 = vmatpush1.xpose.msra.mxu0 0.0
    %573 = vmatprep.subr.mxu0 0.0
    %574 = vmatpush1.xpose.msra.mxu0 0.0
    %575 = vmatprep.subr.mxu0 0.0
    %576 = vmatpush1.xpose.msra.mxu0 0.0
    %577 = vmatprep.subr.mxu0 0.0
    %578 = vmatpush1.xpose.msra.mxu0 0.0
    %579 = vmatprep.subr.mxu0 0.0
    %580 = vmatpush1.xpose.msra.mxu0 0.0
    %581 = vmatprep.subr.mxu0 0.0
    %582 = vmatpush1.xpose.msra.mxu0 0.0
    %583 = vmatprep.subr.mxu0 0.0
    %584 = vmatpush1.xpose.msra.mxu0 0.0
    %585 = vmatprep.subr.mxu0 0.0
    %586 = vmatpush1.xpose.msra.mxu0 0.0
    %587 = vmatprep.subr.mxu0 0.0
    %588 = vmatpush1.xpose.msra.mxu0 0.0
    %589 = vmatprep.subr.mxu0 0.0
    %590 = vmatpush1.xpose.msra.mxu0 0.0
    %591 = vmatprep.subr.mxu0 0.0
    %592 = vmatpush1.xpose.msra.mxu0 0.0
    %593 = vmatprep.subr.mxu0 0.0
    %594 = vmatpush1.xpose.msra.mxu0 0.0
    %595 = vmatprep.subr.mxu0 0.0
    %596 = vmatpush1.xpose.msra.mxu0 0.0
    %597 = vmatprep.subr.mxu0 0.0
    %598 = vmatpush1.xpose.msra.mxu0 0.0
    %599 = vmatprep.subr.mxu0 0.0
    %600 = vmatpush1.xpose.msra.mxu0 0.0
    %601 = vmatprep.subr.mxu0 0.0
    %602 = vmatpush1.xpose.msra.mxu0 0.0
    %603 = vmatprep.subr.mxu0 0.0
    %604 = vmatpush1.xpose.msra.mxu0 0.0
    %605 = vmatprep.mubr.f32.mxu0 0.0
    %606 = vmatmul.mubr.f32.gmra.mrb[0].mxu0 %v524
    %v607 = vpop.f32.mrb[0].mxu0
    %v608 = vadd.f32 %v519, %v607
    %v609 = vpop.f32.mrb[0].mxu0
    %610 = vmatprep.mubr.f32.mxu0 0.0
    %611 = vmatmul.mubr.f32.gmra.mrb[0].mxu0 %v527
    %v612 = vpop.f32.mrb[0].mxu0
    %v613 = vadd.f32 %v520, %v612
    %v614 = vpop.f32.mrb[0].mxu0
    %615 = vmatprep.mubr.f32.mxu0 0.0
    %616 = vmatmul.mubr.f32.gmra.mrb[0].mxu0 %v530
    %v617 = vpop.f32.mrb[0].mxu0
    %v618 = vadd.f32 %v521, %v617
    %v619 = vpop.f32.mrb[0].mxu0
    %620 = vmatprep.mubr.f32.mxu0 0.0
    %621 = vmatmul.mubr.f32.gmra.mrb[0].mxu0 %v533
    %v622 = vpop.f32.mrb[0].mxu0
    %v623 = vadd.f32 %v522, %v622
    %v624 = vpop.f32.mrb[0].mxu0
    %625 = vdwg.mxu0
    %v626 = vsel %vm199, %v608, -inf
    %627 = vmax.xlane.f32.xlu0 %v626
    %v628 = vpop.xlane.xlu0 %627
    %v629 = vsel %vm199, %v613, -inf
    %630 = vmax.xlane.f32.xlu0 %v629
    %v631 = vpop.xlane.xlu0 %630
    %v632 = vsel %vm199, %v618, -inf
    %633 = vmax.xlane.f32.xlu0 %v632
    %v634 = vpop.xlane.xlu0 %633
    %v635 = vsel %vm199, %v623, -inf
    %636 = vmax.xlane.f32.xlu0 %v635
    %v637 = vpop.xlane.xlu0 %636
    %v638 = vsub.f32 %v608, %v628
    %v639 = vsub.f32 %v613, %v631
    %v640 = vsub.f32 %v618, %v634
    %v641 = vsub.f32 %v623, %v637
    %v642 = vmul.f32 %v638, 1.442695
    %v643 = vpow.pop %v642
    %v644 = vmul.f32 %v639, 1.442695
    %v645 = vpow.pop %v644
    %v646 = vmul.f32 %v640, 1.442695
    %v647 = vpow.pop %v646
    %v648 = vmul.f32 %v641, 1.442695
    %v649 = vpow.pop %v648
    %v650 = vsel %vm199, %v643, 0.0
    %651 = vadd.xlane.f32.xlu0 %v650
    %v652 = vpop.xlane.xlu0 %651
    %v653 = vsel %vm199, %v645, 0.0
    %654 = vadd.xlane.f32.xlu0 %v653
    %v655 = vpop.xlane.xlu0 %654
    %v656 = vsel %vm199, %v647, 0.0
    %657 = vadd.xlane.f32.xlu0 %v656
    %v658 = vpop.xlane.xlu0 %657
    %v659 = vsel %vm199, %v649, 0.0
    %660 = vadd.xlane.f32.xlu0 %v659
    %v661 = vpop.xlane.xlu0 %660
    %v662 = vrcp.pop %v652
    %v663 = vmul.f32 %v643, %v662
    %v664 = vrcp.pop %v655
    %v665 = vmul.f32 %v645, %v664
    %v666 = vrcp.pop %v658
    %v667 = vmul.f32 %v647, %v666
    %v668 = vrcp.pop %v661
    %v669 = vmul.f32 %v649, %v668
    %v671 = vsel %vm199, %v663, 0
    %v674 = vsel %vm199, %v665, 0
    %v677 = vsel %vm199, %v667, 0
    %v680 = vsel %vm199, %v669, 0
    %682 = vmatprep.subr.mxu0 0.0
    %683 = vmatpush1.msra.mxu0 %v508
    %684 = vmatprep.subr.mxu0 0.0
    %685 = vmatpush1.msra.mxu0 %v510
    %686 = vmatprep.subr.mxu0 0.0
    %687 = vmatpush1.msra.mxu0 %v512
    %688 = vmatprep.subr.mxu0 0.0
    %689 = vmatpush1.msra.mxu0 %v514
    %690 = vmatprep.subr.mxu0 0.0
    %691 = vmatpush1.msra.mxu0 %v516
    %692 = vmatprep.subr.mxu0 0.0
    %693 = vmatpush1.msra.mxu0 %v518
    %694 = vmatprep.subr.mxu0 0.0
    %695 = vmatpush1.msra.mxu0 0.0
    %696 = vmatprep.subr.mxu0 0.0
    %697 = vmatpush1.msra.mxu0 0.0
    %698 = vmatprep.subr.mxu0 0.0
    %699 = vmatpush1.msra.mxu0 0.0
    %700 = vmatprep.subr.mxu0 0.0
    %701 = vmatpush1.msra.mxu0 0.0
    %702 = vmatprep.subr.mxu0 0.0
    %703 = vmatpush1.msra.mxu0 0.0
    %704 = vmatprep.subr.mxu0 0.0
    %705 = vmatpush1.msra.mxu0 0.0
    %706 = vmatprep.subr.mxu0 0.0
    %707 = vmatpush1.msra.mxu0 0.0
    %708 = vmatprep.subr.mxu0 0.0
    %709 = vmatpush1.msra.mxu0 0.0
    %710 = vmatprep.subr.mxu0 0.0
    %711 = vmatpush1.msra.mxu0 0.0
    %712 = vmatprep.subr.mxu0 0.0
    %713 = vmatpush1.msra.mxu0 0.0
    %714 = vmatprep.subr.mxu0 0.0
    %715 = vmatpush1.msra.mxu0 0.0
    %716 = vmatprep.subr.mxu0 0.0
    %717 = vmatpush1.msra.mxu0 0.0
    %718 = vmatprep.subr.mxu0 0.0
    %719 = vmatpush1.msra.mxu0 0.0
    %720 = vmatprep.subr.mxu0 0.0
    %721 = vmatpush1.msra.mxu0 0.0
    %722 = vmatprep.subr.mxu0 0.0
    %723 = vmatpush1.msra.mxu0 0.0
    %724 = vmatprep.subr.mxu0 0.0
    %725 = vmatpush1.msra.mxu0 0.0
    %726 = vmatprep.subr.mxu0 0.0
    %727 = vmatpush1.msra.mxu0 0.0
    %728 = vmatprep.subr.mxu0 0.0
    %729 = vmatpush1.msra.mxu0 0.0
    %730 = vmatprep.subr.mxu0 0.0
    %731 = vmatpush1.msra.mxu0 0.0
    %732 = vmatprep.subr.mxu0 0.0
    %733 = vmatpush1.msra.mxu0 0.0
    %734 = vmatprep.subr.mxu0 0.0
    %735 = vmatpush1.msra.mxu0 0.0
    %736 = vmatprep.subr.mxu0 0.0
    %737 = vmatpush1.msra.mxu0 0.0
    %738 = vmatprep.subr.mxu0 0.0
    %739 = vmatpush1.msra.mxu0 0.0
    %740 = vmatprep.subr.mxu0 0.0
    %741 = vmatpush1.msra.mxu0 0.0
    %742 = vmatprep.subr.mxu0 0.0
    %743 = vmatpush1.msra.mxu0 0.0
    %744 = vmatprep.subr.mxu0 0.0
    %745 = vmatpush1.msra.mxu0 0.0
    %746 = vmatprep.mubr.f32.mxu0 0.0
    %747 = vmatmul.mubr.f32.gmra.mrb[0].mxu0 %v671
    %v748 = vpop.f32.mrb[0].mxu0
    %v749 = vadd.f32 0.0, %v748
    %v750 = vpop.f32.mrb[0].mxu0
    %751 = vmatprep.mubr.f32.mxu0 0.0
    %752 = vmatmul.mubr.f32.gmra.mrb[0].mxu0 %v674
    %v753 = vpop.f32.mrb[0].mxu0
    %v754 = vadd.f32 0.0, %v753
    %v755 = vpop.f32.mrb[0].mxu0
    %756 = vmatprep.mubr.f32.mxu0 0.0
    %757 = vmatmul.mubr.f32.gmra.mrb[0].mxu0 %v677
    %v758 = vpop.f32.mrb[0].mxu0
    %v759 = vadd.f32 0.0, %v758
    %v760 = vpop.f32.mrb[0].mxu0
    %761 = vmatprep.mubr.f32.mxu0 0.0
    %762 = vmatmul.mubr.f32.gmra.mrb[0].mxu0 %v680
    %v763 = vpop.f32.mrb[0].mxu0
    %v764 = vadd.f32 0.0, %v763
    %v765 = vpop.f32.mrb[0].mxu0
    %766 = vdwg.mxu0
    %v767 = vld [vmem:[%s7] sm:$0xff]
    %v768 = vld [vmem:[%s7 + $0x8] sm:$0xff]
    %v769 = vld [vmem:[%s7 + $0x10] sm:$0xff]
    %v770 = vld [vmem:[%s7 + $0x18] sm:$0xff]
    %772 = vset.pattern.permute.xlu0 0
    %773 = vperm.xlu0 %772, %v749
    %v774 = vpop.permute.xlu0 %773
    %777 = vset.pattern.permute.xlu0 0
    %778 = vperm.xlu0 %777, %v754
    %v779 = vpop.permute.xlu0 %778
    %782 = vset.pattern.permute.xlu0 0
    %783 = vperm.xlu0 %782, %v759
    %v784 = vpop.permute.xlu0 %783
    %787 = vset.pattern.permute.xlu0 0
    %788 = vperm.xlu0 %787, %v764
    %v789 = vpop.permute.xlu0 %788
    %v791 = vmul.f32 %v767, %v774
    %v792 = vmul.f32 %v768, %v779
    %v793 = vmul.f32 %v769, %v784
    %v794 = vmul.f32 %v770, %v789
    %s795 = scalar_lea.vmem %s7, 32
    %v796 = vld [vmem:[%s795] sm:$0xff]
    %v797 = vld [vmem:[%s795 + $0x8] sm:$0xff]
    %v798 = vld [vmem:[%s795 + $0x10] sm:$0xff]
    %v799 = vld [vmem:[%s795 + $0x18] sm:$0xff]
    %800 = vset.pattern.permute.xlu0 1
    %801 = vperm.xlu0 %800, %v749
    %v802 = vpop.permute.xlu0 %801
    %804 = vset.pattern.permute.xlu0 1
    %805 = vperm.xlu0 %804, %v754
    %v806 = vpop.permute.xlu0 %805
    %808 = vset.pattern.permute.xlu0 1
    %809 = vperm.xlu0 %808, %v759
    %v810 = vpop.permute.xlu0 %809
    %812 = vset.pattern.permute.xlu0 1
    %813 = vperm.xlu0 %812, %v764
    %v814 = vpop.permute.xlu0 %813
    %v816 = vmul.f32 %v796, %v802
    %v817 = vmul.f32 %v797, %v806
    %v818 = vmul.f32 %v798, %v810
    %v819 = vmul.f32 %v799, %v814
    %v820 = vadd.f32 %v791, %v816
    %v821 = vadd.f32 %v792, %v817
    %v822 = vadd.f32 %v793, %v818
    %v823 = vadd.f32 %v794, %v819
    %s824 = scalar_lea.vmem %s7, 64
    %v825 = vld [vmem:[%s824] sm:$0xff]
    %v826 = vld [vmem:[%s824 + $0x8] sm:$0xff]
    %v827 = vld [vmem:[%s824 + $0x10] sm:$0xff]
    %v828 = vld [vmem:[%s824 + $0x18] sm:$0xff]
    %829 = vset.pattern.permute.xlu0 2
    %830 = vperm.xlu0 %829, %v749
    %v831 = vpop.permute.xlu0 %830
    %833 = vset.pattern.permute.xlu0 2
    %834 = vperm.xlu0 %833, %v754
    %v835 = vpop.permute.xlu0 %834
    %837 = vset.pattern.permute.xlu0 2
    %838 = vperm.xlu0 %837, %v759
    %v839 = vpop.permute.xlu0 %838
    %841 = vset.pattern.permute.xlu0 2
    %842 = vperm.xlu0 %841, %v764
    %v843 = vpop.permute.xlu0 %842
    %v845 = vmul.f32 %v825, %v831
    %v846 = vmul.f32 %v826, %v835
    %v847 = vmul.f32 %v827, %v839
    %v848 = vmul.f32 %v828, %v843
    %v849 = vadd.f32 %v820, %v845
    %v850 = vadd.f32 %v821, %v846
    %v851 = vadd.f32 %v822, %v847
    %v852 = vadd.f32 %v823, %v848
    %s853 = scalar_lea.vmem %s7, 96
    %v854 = vld [vmem:[%s853] sm:$0xff]
    %v855 = vld [vmem:[%s853 + $0x8] sm:$0xff]
    %v856 = vld [vmem:[%s853 + $0x10] sm:$0xff]
    %v857 = vld [vmem:[%s853 + $0x18] sm:$0xff]
    %858 = vset.pattern.permute.xlu0 3
    %859 = vperm.xlu0 %858, %v749
    %v860 = vpop.permute.xlu0 %859
    %862 = vset.pattern.permute.xlu0 3
    %863 = vperm.xlu0 %862, %v754
    %v864 = vpop.permute.xlu0 %863
    %866 = vset.pattern.permute.xlu0 3
    %867 = vperm.xlu0 %866, %v759
    %v868 = vpop.permute.xlu0 %867
    %870 = vset.pattern.permute.xlu0 3
    %871 = vperm.xlu0 %870, %v764
    %v872 = vpop.permute.xlu0 %871
    %v874 = vmul.f32 %v854, %v860
    %v875 = vmul.f32 %v855, %v864
    %v876 = vmul.f32 %v856, %v868
    %v877 = vmul.f32 %v857, %v872
    %v878 = vadd.f32 %v849, %v874
    %v879 = vadd.f32 %v850, %v875
    %v880 = vadd.f32 %v851, %v876
    %v881 = vadd.f32 %v852, %v877
    %v882 = vpack.c.bf16 %v879, %v878
    %v883 = vpack.c.bf16 %v881, %v880
    %v884 = vpack.c.bf16 %v290, %v287
    %v885 = vpack.c.bf16 %v298, %v295
    %v887 = vsel %vm194, %v882, 0
    %v890 = vsel %vm194, %v883, 0
    %892 = vmatprep.subr.bf16.mxu0 0
    %893 = vmatpush1.bf16.msra.mxu0 %v884
    %894 = vmatprep.subr.bf16.mxu0 0
    %895 = vmatpush1.bf16.msra.mxu0 %v885
    %896 = vmatprep.subr.bf16.mxu0 0
    %897 = vmatpush1.bf16.msra.mxu0 0
    %898 = vmatprep.subr.bf16.mxu0 0
    %899 = vmatpush1.bf16.msra.mxu0 0
    %900 = vmatprep.subr.bf16.mxu0 0
    %901 = vmatpush1.bf16.msra.mxu0 0
    %902 = vmatprep.subr.bf16.mxu0 0
    %903 = vmatpush1.bf16.msra.mxu0 0
    %904 = vmatprep.subr.bf16.mxu0 0
    %905 = vmatpush1.bf16.msra.mxu0 0
    %906 = vmatprep.subr.bf16.mxu0 0
    %907 = vmatpush1.bf16.msra.mxu0 0
    %908 = vmatprep.subr.bf16.mxu0 0
    %909 = vmatpush1.bf16.msra.mxu0 0
    %910 = vmatprep.subr.bf16.mxu0 0
    %911 = vmatpush1.bf16.msra.mxu0 0
    %912 = vmatprep.subr.bf16.mxu0 0
    %913 = vmatpush1.bf16.msra.mxu0 0
    %914 = vmatprep.subr.bf16.mxu0 0
    %915 = vmatpush1.bf16.msra.mxu0 0
    %916 = vmatprep.subr.bf16.mxu0 0
    %917 = vmatpush1.bf16.msra.mxu0 0
    %918 = vmatprep.subr.bf16.mxu0 0
    %919 = vmatpush1.bf16.msra.mxu0 0
    %920 = vmatprep.subr.bf16.mxu0 0
    %921 = vmatpush1.bf16.msra.mxu0 0
    %922 = vmatprep.subr.bf16.mxu0 0
    %923 = vmatpush1.bf16.msra.mxu0 0
    %924 = vmatprep.mubr.bf16.mxu0 0
    %925 = vmatmul.mubr.bf16.gmra.mrb[0].mxu0 %v887
    %v926 = vpop.f32.mrb[0].mxu0
    %v927 = vadd.f32 0.0, %v926
    %v928 = vpop.f32.mrb[0].mxu0
    %v929 = vpop.f32.mrb[0].mxu0
    %v930 = vadd.f32 0.0, %v929
    %v931 = vpop.f32.mrb[0].mxu0
    %932 = vmatprep.mubr.bf16.mxu0 0
    %933 = vmatmul.mubr.bf16.gmra.mrb[0].mxu0 %v890
    %v934 = vpop.f32.mrb[0].mxu0
    %v935 = vadd.f32 0.0, %v934
    %v936 = vpop.f32.mrb[0].mxu0
    %v937 = vpop.f32.mrb[0].mxu0
    %v938 = vadd.f32 0.0, %v937
    %v939 = vpop.f32.mrb[0].mxu0
    %940 = vdwg.mxu0
    %941 = vst.msk [vmem:[#allocation3] sm:$0xff] %vm194, %v927
    %942 = vst.msk [vmem:[#allocation3 + $0x8] sm:$0xff] %vm194, %v930
    %943 = vst.msk [vmem:[#allocation3 + $0x10] sm:$0xff] %vm194, %v935
    %944 = vst.msk [vmem:[#allocation3 + $0x18] sm:$0xff] %vm194, %v938
    %v945 = vld [vmem:[%s8] sm:$0xf]
    %v946 = vpack.c.bf16 %v930, %v927
    %v947 = vpack.c.bf16 %v938, %v935
    %v949 = vsel %vm194, %v945, 0
    %951 = vmatprep.subr.bf16.mxu0 0
    %952 = vmatpush1.bf16.msra.mxu0 %v946
    %953 = vmatprep.subr.bf16.mxu0 0
    %954 = vmatpush1.bf16.msra.mxu0 %v947
    %955 = vmatprep.subr.bf16.mxu0 0
    %956 = vmatpush1.bf16.msra.mxu0 0
    %957 = vmatprep.subr.bf16.mxu0 0
    %958 = vmatpush1.bf16.msra.mxu0 0
    %959 = vmatprep.subr.bf16.mxu0 0
    %960 = vmatpush1.bf16.msra.mxu0 0
    %961 = vmatprep.subr.bf16.mxu0 0
    %962 = vmatpush1.bf16.msra.mxu0 0
    %963 = vmatprep.subr.bf16.mxu0 0
    %964 = vmatpush1.bf16.msra.mxu0 0
    %965 = vmatprep.subr.bf16.mxu0 0
    %966 = vmatpush1.bf16.msra.mxu0 0
    %967 = vmatprep.subr.bf16.mxu0 0
    %968 = vmatpush1.bf16.msra.mxu0 0
    %969 = vmatprep.subr.bf16.mxu0 0
    %970 = vmatpush1.bf16.msra.mxu0 0
    %971 = vmatprep.subr.bf16.mxu0 0
    %972 = vmatpush1.bf16.msra.mxu0 0
    %973 = vmatprep.subr.bf16.mxu0 0
    %974 = vmatpush1.bf16.msra.mxu0 0
    %975 = vmatprep.subr.bf16.mxu0 0
    %976 = vmatpush1.bf16.msra.mxu0 0
    %977 = vmatprep.subr.bf16.mxu0 0
    %978 = vmatpush1.bf16.msra.mxu0 0
    %979 = vmatprep.subr.bf16.mxu0 0
    %980 = vmatpush1.bf16.msra.mxu0 0
    %981 = vmatprep.subr.bf16.mxu0 0
    %982 = vmatpush1.bf16.msra.mxu0 0
    %983 = vmatprep.mubr.bf16.mxu0 0
    %984 = vmatmul.mubr.bf16.gmra.mrb[0].mxu0 %v949
    %v985 = vpop.f32.mrb[0].mxu0
    %v986 = vadd.f32 0.0, %v985
    %v987 = vpop.f32.mrb[0].mxu0
    %v988 = vpop.f32.mrb[0].mxu0
    %v989 = vpop.f32.mrb[0].mxu0
    %990 = vdwg.mxu0
    %991 = vst.msk [vmem:[#allocation5] sm:$0xff] %vm194, %v986
    // Predicated region
    $region38: #{gbst_forward.1} parent=1 // pred_check
      _
    $region39: #{gbst_forward.1} parent=1 // pred_check_branch
      %993 = sbr.rel (0) target = $region41
    $region40: #{gbst_forward.1} parent=1 // pred_region
      %s995 = ssub.s32 512, 512
      %996 = vsyncadd [#allocation4], %s995
      %s997 = sshll.u32 [#allocation3], 4
      %s998 = int_to_ptr.vmem [resolvable:$true] %s997
      %1003 = dma.vmem_to_hbm [thread:$0]  %s998, 512, %s9, [#allocation4], 128, 128, 8
    $region41: #{gbst_forward.1} parent=1 // pred_fallthru
      _
    // Predicated region
    $region42: #{gbst_forward.1} parent=1 // pred_check
      _
    $region43: #{gbst_forward.1} parent=1 // pred_check_branch
      %1005 = sbr.rel (0) target = $region45
    $region44: #{gbst_forward.1} parent=1 // pred_region
      %s1007 = ssub.s32 128, 128
      %1008 = vsyncadd [#allocation6], %s1007
      %s1010 = sshll.u32 [#allocation5], 4
      %s1011 = int_to_ptr.vmem [resolvable:$true] %s1010
      %1013 = dma.vmem_to_hbm [thread:$0]  %s1011, 128, %s10, [#allocation6]
    $region45: #{gbst_forward.1} parent=1 // pred_fallthru
      _
    // Predicated region
    $region46: #{gbst_forward.1} parent=1 // pred_check
      _
    $region47: #{gbst_forward.1} parent=1 // pred_check_branch
      %1015 = sbr.rel (0) target = $region49
    $region48: #{gbst_forward.1} parent=1 // pred_region
      %1016 = dma.done [#allocation4], 512
    $region49: #{gbst_forward.1} parent=1 // pred_fallthru
      _
    // Predicated region
    $region50: #{gbst_forward.1} parent=1 // pred_check
      _
    $region51: #{gbst_forward.1} parent=1 // pred_check_branch
      %1018 = sbr.rel (0) target = $region53
    $region52: #{gbst_forward.1} parent=1 // pred_region
      %1019 = dma.done [#allocation6], 128
    $region53: #{gbst_forward.1} parent=1 // pred_fallthru
      _
    %1020 = vsyncpa [#allocation4], 1
    %1021 = vsyncpa [#allocation6], 1

</llo_original>
